<compile_context>
chip_gen: v7x
topology: tpu7x:2x2x1
jax: 0.10.0
libtpu: 0.0.40
codegen_flags: <defaults>
</compile_context>

<pallas_src>
import functools

import jax
import jax.numpy as jnp
from jax.experimental import pallas as pl
from jax.experimental.pallas import tpu as pltpu


def _round_up(x, m):
    return ((x + m - 1) // m) * m


def dense_network_kernel(ids_ref, ew1_ref, b1_ref, w2_ref, b2_ref, out_ref):
    """One batch tile of the fused forward pass.

    ids_ref: (TB, S)  int32   token ids for this batch tile
    ew1_ref: (Vp, Hp) f32     folded embedding @ layer_1 weight (zero padded)
    b1_ref:  (1, Hp)  f32     layer_1 bias (zero padded)
    w2_ref:  (Hp, Co) f32     layer_2 weight (zero padded)
    b2_ref:  (1, Co)  f32     layer_2 bias (zero padded)
    out_ref: (TB, Co) f32
    """
    ids = ids_ref[...]
    tb, seq = ids.shape
    vp = ew1_ref.shape[0]

    # Fused embedding gather + sum-pool:
    #   sum_s E[ids[b, s]] @ W1  ==  counts[b, :] @ (E @ W1)
    # with counts[b, v] = #{s : ids[b, s] == v}.  Built on the VPU (no HBM
    # traffic beyond the raw ids), consumed by the MXU.
    iota_v = jax.lax.broadcasted_iota(jnp.int32, (tb, vp), 1)
    counts = jnp.zeros((tb, vp), jnp.float32)
    for s in range(seq):  # S is small and static -> fully unrolled
        counts = counts + (ids[:, s:s + 1] == iota_v).astype(jnp.float32)

    h = jnp.dot(counts, ew1_ref[...], preferred_element_type=jnp.float32)
    h = jnp.maximum(h + b1_ref[...], 0.0)                      # F.relu(layer_1)
    o = jnp.dot(h, w2_ref[...], preferred_element_type=jnp.float32)
    out_ref[...] = jnp.maximum(o + b2_ref[...], 0.0)           # F.relu(layer_2)


@functools.partial(jax.jit, static_argnames=("batch_tile",))
def dense_network_forward(x_ids, embedding_table, w1, b1, w2, b2, *,
                          batch_tile=512):
    """Forward pass matching DenseNetwork.forward.

    x_ids:            (B, S) int32 token indices
    embedding_table:  (V, D) f32   (frozen, "from_pretrained")
    w1: (D, H) f32 (layer_1 weight, stored transposed vs torch), b1: (H,)
    w2: (H, C) f32 (layer_2 weight, stored transposed vs torch), b2: (C,)
    returns:          (B, C) f32
    """
    B, S = x_ids.shape
    V, _ = embedding_table.shape
    H = w1.shape[1]
    C = w2.shape[1]

    # MXU/lane-dense padding for the contracted dims; narrow output slab.
    Vp = _round_up(V, 128)
    Hp = _round_up(H, 128)
    Co = _round_up(C, 8)   # 4 -> 8: masked stores, but ~16x less HBM writeback

    # Batch tile: big enough to amortize per-step pipeline overhead, but keep
    # >= 2 grid steps whenever B allows so both v7x TensorCores get work.
    half = _round_up(max((B + 1) // 2, 1), 8)
    TB = max(8, min(batch_tile, half))
    Bp = _round_up(B, TB)

    # Fold the frozen embedding table into layer 1 once (exact f32 matmul).
    ew1 = jnp.dot(embedding_table.astype(jnp.float32), w1.astype(jnp.float32),
                  precision=jax.lax.Precision.HIGHEST)
    ew1_p = jnp.pad(ew1, ((0, Vp - V), (0, Hp - H)))
    b1_p = jnp.pad(b1.astype(jnp.float32).reshape(1, -1), ((0, 0), (0, Hp - H)))
    w2_p = jnp.pad(w2.astype(jnp.float32), ((0, Hp - H), (0, Co - C)))
    b2_p = jnp.pad(b2.astype(jnp.float32).reshape(1, -1), ((0, 0), (0, Co - C)))

    # Pad batch with token 0; padded rows produce garbage that is sliced off.
    ids_p = jnp.pad(x_ids.astype(jnp.int32), ((0, Bp - B), (0, 0)))

    grid = (Bp // TB,)
    out_p = pl.pallas_call(
        dense_network_kernel,
        out_shape=jax.ShapeDtypeStruct((Bp, Co), jnp.float32),
        grid_spec=pltpu.PrefetchScalarGridSpec(
            num_scalar_prefetch=0,
            grid=grid,
            in_specs=[
                pl.BlockSpec((TB, S), lambda i: (i, 0)),    # ids: tiled over batch
                pl.BlockSpec((Vp, Hp), lambda i: (0, 0)),   # EW1 (VMEM resident)
                pl.BlockSpec((1, Hp), lambda i: (0, 0)),    # b1  (resident)
                pl.BlockSpec((Hp, Co), lambda i: (0, 0)),   # w2  (resident)
                pl.BlockSpec((1, Co), lambda i: (0, 0)),    # b2  (resident)
            ],
            out_specs=pl.BlockSpec((TB, Co), lambda i: (i, 0)),
        ),
        compiler_params=pltpu.CompilerParams(
            dimension_semantics=("parallel",),  # megacore sharding on v7x
        ),
    )(ids_p, ew1_p, b1_p, w2_p, b2_p)

    return out_p[:B, :C]


if __name__ == "__main__":
    # Small, deterministic synthetic setup consistent with the module.
    vocab_size = 50
    emb_dim = 64          # word_vector_length = embeddings.size(1)
    hidden_dim = 100
    num_classes = 4
    batch = 2
    seq = 8

    key = jax.random.PRNGKey(0)
    k_emb, k_w1, k_b1, k_w2, k_b2, k_x = jax.random.split(key, 6)

    # Frozen "pretrained" embeddings.
    embedding_table = jax.random.normal(k_emb, (vocab_size, emb_dim),
                                        dtype=jnp.float32)

    # Linear layer params (stored as (in, out); torch stores (out, in)).
    w1 = jax.random.normal(k_w1, (emb_dim, hidden_dim), dtype=jnp.float32) * 0.05
    b1 = jax.random.normal(k_b1, (hidden_dim,), dtype=jnp.float32) * 0.05
    w2 = jax.random.normal(k_w2, (hidden_dim, num_classes), dtype=jnp.float32) * 0.05
    b2 = jax.random.normal(k_b2, (num_classes,), dtype=jnp.float32) * 0.05

    # Token id inputs.
    x_ids = jax.random.randint(k_x, (batch, seq), minval=0, maxval=vocab_size,
                               dtype=jnp.int32)

    out = dense_network_forward(x_ids, embedding_table, w1, b1, w2, b2)
    out = jax.block_until_ready(out)

    # Pure-JAX reference check (identical to the torch forward).
    pooled_ref = jnp.sum(embedding_table[x_ids], axis=1)
    h_ref = jnp.maximum(pooled_ref @ w1 + b1, 0.0)
    o_ref = jnp.maximum(h_ref @ w2 + b2, 0.0)
    assert out.shape == (batch, num_classes)
    assert jnp.allclose(out, o_ref, atol=5e-4, rtol=5e-4)

    print("KERNEL_OK")
</pallas_src>

<mosaic_0001>
module attributes {stable_mosaic.version = 11 : i64} {
  func.func @dense_network_kernel(%arg0: i32, %arg1: memref<8x8xi32, #tpu.memory_space<vmem>>, %arg2: memref<128x128xf32, #tpu.memory_space<vmem>>, %arg3: memref<1x128xf32, #tpu.memory_space<vmem>>, %arg4: memref<128x8xf32, #tpu.memory_space<vmem>>, %arg5: memref<1x8xf32, #tpu.memory_space<vmem>>, %arg6: memref<8x8xf32, #tpu.memory_space<vmem>>) attributes {dimension_semantics = [#tpu.dimension_semantics<parallel>], iteration_bounds = array<i64: 1>, scalar_prefetch = 0 : i64, scratch_operands = 0 : i64, tpu.core_type = #tpu.core_type<tc>, window_params = [{transform_indices = @transform_0, window_bounds = array<i64: 8, 8>}, {pipeline_mode = #tpu.pipeline_mode<synchronous>, transform_indices = @transform_1, window_bounds = array<i64: 128, 128>}, {pipeline_mode = #tpu.pipeline_mode<synchronous>, transform_indices = @transform_2, window_bounds = array<i64: 1, 128>}, {pipeline_mode = #tpu.pipeline_mode<synchronous>, transform_indices = @transform_3, window_bounds = array<i64: 128, 8>}, {pipeline_mode = #tpu.pipeline_mode<synchronous>, transform_indices = @transform_4, window_bounds = array<i64: 1, 8>}, {transform_indices = @transform_5, window_bounds = array<i64: 8, 8>}]} {
    %c0 = arith.constant 0 : index
    %c0_0 = arith.constant 0 : index
    %0 = vector.load %arg1[%c0, %c0_0] : memref<8x8xi32, #tpu.memory_space<vmem>>, vector<8x8xi32>
    %1 = tpu.iota {dimensions = array<i32: 1>} : vector<8x128xi32>
    %cst = arith.constant 0.000000e+00 : f32
    %2 = vector.broadcast %cst : f32 to vector<8x128xf32>
    %3 = vector.extract_strided_slice %0 {offsets = [0, 0], sizes = [8, 1], strides = [1, 1]} : vector<8x8xi32> to vector<8x1xi32>
    %4 = vector.broadcast %3 : vector<8x1xi32> to vector<8x128xi32>
    %5 = arith.cmpi eq, %4, %1 : vector<8x128xi32>
    %6 = arith.extui %5 : vector<8x128xi1> to vector<8x128xi32>
    %7 = arith.sitofp %6 : vector<8x128xi32> to vector<8x128xf32>
    %8 = arith.addf %2, %7 : vector<8x128xf32>
    %9 = vector.extract_strided_slice %0 {offsets = [0, 1], sizes = [8, 1], strides = [1, 1]} : vector<8x8xi32> to vector<8x1xi32>
    %10 = vector.broadcast %9 : vector<8x1xi32> to vector<8x128xi32>
    %11 = arith.cmpi eq, %10, %1 : vector<8x128xi32>
    %12 = arith.extui %11 : vector<8x128xi1> to vector<8x128xi32>
    %13 = arith.sitofp %12 : vector<8x128xi32> to vector<8x128xf32>
    %14 = arith.addf %8, %13 : vector<8x128xf32>
    %15 = vector.extract_strided_slice %0 {offsets = [0, 2], sizes = [8, 1], strides = [1, 1]} : vector<8x8xi32> to vector<8x1xi32>
    %16 = vector.broadcast %15 : vector<8x1xi32> to vector<8x128xi32>
    %17 = arith.cmpi eq, %16, %1 : vector<8x128xi32>
    %18 = arith.extui %17 : vector<8x128xi1> to vector<8x128xi32>
    %19 = arith.sitofp %18 : vector<8x128xi32> to vector<8x128xf32>
    %20 = arith.addf %14, %19 : vector<8x128xf32>
    %21 = vector.extract_strided_slice %0 {offsets = [0, 3], sizes = [8, 1], strides = [1, 1]} : vector<8x8xi32> to vector<8x1xi32>
    %22 = vector.broadcast %21 : vector<8x1xi32> to vector<8x128xi32>
    %23 = arith.cmpi eq, %22, %1 : vector<8x128xi32>
    %24 = arith.extui %23 : vector<8x128xi1> to vector<8x128xi32>
    %25 = arith.sitofp %24 : vector<8x128xi32> to vector<8x128xf32>
    %26 = arith.addf %20, %25 : vector<8x128xf32>
    %27 = vector.extract_strided_slice %0 {offsets = [0, 4], sizes = [8, 1], strides = [1, 1]} : vector<8x8xi32> to vector<8x1xi32>
    %28 = vector.broadcast %27 : vector<8x1xi32> to vector<8x128xi32>
    %29 = arith.cmpi eq, %28, %1 : vector<8x128xi32>
    %30 = arith.extui %29 : vector<8x128xi1> to vector<8x128xi32>
    %31 = arith.sitofp %30 : vector<8x128xi32> to vector<8x128xf32>
    %32 = arith.addf %26, %31 : vector<8x128xf32>
    %33 = vector.extract_strided_slice %0 {offsets = [0, 5], sizes = [8, 1], strides = [1, 1]} : vector<8x8xi32> to vector<8x1xi32>
    %34 = vector.broadcast %33 : vector<8x1xi32> to vector<8x128xi32>
    %35 = arith.cmpi eq, %34, %1 : vector<8x128xi32>
    %36 = arith.extui %35 : vector<8x128xi1> to vector<8x128xi32>
    %37 = arith.sitofp %36 : vector<8x128xi32> to vector<8x128xf32>
    %38 = arith.addf %32, %37 : vector<8x128xf32>
    %39 = vector.extract_strided_slice %0 {offsets = [0, 6], sizes = [8, 1], strides = [1, 1]} : vector<8x8xi32> to vector<8x1xi32>
    %40 = vector.broadcast %39 : vector<8x1xi32> to vector<8x128xi32>
    %41 = arith.cmpi eq, %40, %1 : vector<8x128xi32>
    %42 = arith.extui %41 : vector<8x128xi1> to vector<8x128xi32>
    %43 = arith.sitofp %42 : vector<8x128xi32> to vector<8x128xf32>
    %44 = arith.addf %38, %43 : vector<8x128xf32>
    %45 = vector.extract_strided_slice %0 {offsets = [0, 7], sizes = [8, 1], strides = [1, 1]} : vector<8x8xi32> to vector<8x1xi32>
    %46 = vector.broadcast %45 : vector<8x1xi32> to vector<8x128xi32>
    %47 = arith.cmpi eq, %46, %1 : vector<8x128xi32>
    %48 = arith.extui %47 : vector<8x128xi1> to vector<8x128xi32>
    %49 = arith.sitofp %48 : vector<8x128xi32> to vector<8x128xf32>
    %50 = arith.addf %44, %49 : vector<8x128xf32>
    %c0_1 = arith.constant 0 : index
    %c0_2 = arith.constant 0 : index
    %51 = vector.load %arg2[%c0_1, %c0_2] : memref<128x128xf32, #tpu.memory_space<vmem>>, vector<128x128xf32>
    %cst_3 = arith.constant dense<0.000000e+00> : vector<8x128xf32>
    %52 = tpu.matmul %50, %51, %cst_3 {dimension_numbers = #tpu.dot_dimension_numbers<[1], [0], [0], [1], [0, 0, 1, 1], [], []>} : vector<8x128xf32>, vector<128x128xf32>, vector<8x128xf32> -> vector<8x128xf32>
    %c0_4 = arith.constant 0 : index
    %c0_5 = arith.constant 0 : index
    %53 = vector.load %arg3[%c0_4, %c0_5] : memref<1x128xf32, #tpu.memory_space<vmem>>, vector<1x128xf32>
    %54 = vector.broadcast %53 : vector<1x128xf32> to vector<8x128xf32>
    %55 = arith.addf %52, %54 : vector<8x128xf32>
    %cst_6 = arith.constant 0.000000e+00 : f32
    %56 = vector.broadcast %cst_6 : f32 to vector<8x128xf32>
    %57 = arith.maximumf %55, %56 : vector<8x128xf32>
    %c0_7 = arith.constant 0 : index
    %c0_8 = arith.constant 0 : index
    %58 = vector.load %arg4[%c0_7, %c0_8] : memref<128x8xf32, #tpu.memory_space<vmem>>, vector<128x8xf32>
    %cst_9 = arith.constant dense<0.000000e+00> : vector<8x8xf32>
    %59 = tpu.matmul %57, %58, %cst_9 {dimension_numbers = #tpu.dot_dimension_numbers<[1], [0], [0], [1], [0, 0, 1, 1], [], []>} : vector<8x128xf32>, vector<128x8xf32>, vector<8x8xf32> -> vector<8x8xf32>
    %c0_10 = arith.constant 0 : index
    %c0_11 = arith.constant 0 : index
    %60 = vector.load %arg5[%c0_10, %c0_11] : memref<1x8xf32, #tpu.memory_space<vmem>>, vector<1x8xf32>
    %61 = vector.broadcast %60 : vector<1x8xf32> to vector<8x8xf32>
    %62 = arith.addf %59, %61 : vector<8x8xf32>
    %cst_12 = arith.constant 0.000000e+00 : f32
    %63 = vector.broadcast %cst_12 : f32 to vector<8x8xf32>
    %64 = arith.maximumf %62, %63 : vector<8x8xf32>
    %c0_13 = arith.constant 0 : index
    %c0_14 = arith.constant 0 : index
    %65 = vector.load %arg6[%c0_13, %c0_14] : memref<8x8xf32, #tpu.memory_space<vmem>>, vector<8x8xf32>
    tpu.vector_store %arg6[%c0_13, %c0_14], %64 {strides = array<i32>} : memref<8x8xf32, #tpu.memory_space<vmem>>, vector<8x8xf32>,
    return
  }
  func.func @transform_0(%arg0: i32) -> (i32, i32) {
    %c0_i32 = arith.constant 0 : i32
    %c0_i32_0 = arith.constant 0 : i32
    return %arg0, %c0_i32 : i32, i32
  }
  func.func @transform_1(%arg0: i32) -> (i32, i32) {
    %c0_i32 = arith.constant 0 : i32
    %c0_i32_0 = arith.constant 0 : i32
    %c0_i32_1 = arith.constant 0 : i32
    return %c0_i32, %c0_i32_0 : i32, i32
  }
  func.func @transform_2(%arg0: i32) -> (i32, i32) {
    %c0_i32 = arith.constant 0 : i32
    %c0_i32_0 = arith.constant 0 : i32
    %c0_i32_1 = arith.constant 0 : i32
    return %c0_i32, %c0_i32_0 : i32, i32
  }
  func.func @transform_3(%arg0: i32) -> (i32, i32) {
    %c0_i32 = arith.constant 0 : i32
    %c0_i32_0 = arith.constant 0 : i32
    %c0_i32_1 = arith.constant 0 : i32
    return %c0_i32, %c0_i32_0 : i32, i32
  }
  func.func @transform_4(%arg0: i32) -> (i32, i32) {
    %c0_i32 = arith.constant 0 : i32
    %c0_i32_0 = arith.constant 0 : i32
    %c0_i32_1 = arith.constant 0 : i32
    return %c0_i32, %c0_i32_0 : i32, i32
  }
  func.func @transform_5(%arg0: i32) -> (i32, i32) {
    %c0_i32 = arith.constant 0 : i32
    %c0_i32_0 = arith.constant 0 : i32
    return %arg0, %c0_i32 : i32, i32
  }
}

</mosaic_0001>

<llo_original>
// kernel: dense_network_forward.1
$region0: #{dense_network_forward.1}
  #allocation0 [shape = 'u32[]', space=smem, size = 0x4, offset = 0x4, fixed_abs, tag = 'smem constant byte address 0x4 - core index']
  #allocation1 [shape = 'u32[144,128]{1,0:T(1,128)}', space=vmem, size = 0x12000, scoped, tag = 'internal scratch']
  %s0 = inlined_call_operand.vmem [shape: s32[8,8], index: 0, kind: input, shape index: {}]
  %s1 = inlined_call_operand.vmem [shape: f32[128,128], index: 1, kind: input, shape index: {}]
  %s2 = inlined_call_operand.vmem [shape: f32[1,128], index: 2, kind: input, shape index: {}]
  %s3 = inlined_call_operand.vmem [shape: f32[128,8], index: 3, kind: input, shape index: {}]
  %s4 = inlined_call_operand.vmem [shape: f32[1,8], index: 4, kind: input, shape index: {}]
  %s5 = inlined_call_operand.vmem [shape: f32[8,8], index: 5, kind: output, shape index: {}]
  %s6 = sld [smem:[#allocation0]]
  $region30: #{dense_network_forward.1} parent=0
    _
  %s8 = ssub.s32 1, %s6
  %s9 = scalar_select 0, %s8, %s6
  // Predicated region
  $region2: #{dense_network_forward.1} parent=0 // pred_check
    _
  $region3: #{dense_network_forward.1} parent=0 // pred_check_branch
    %11 = sbr.rel (0) target = $region5
  $region4: #{dense_network_forward.1} parent=0 // pred_region
    _
  $region5: #{dense_network_forward.1} parent=0 // pred_fallthru
    _
  // Predicated region
  $region6: #{dense_network_forward.1} parent=0 // pred_check
    _
  $region7: #{dense_network_forward.1} parent=0 // pred_check_branch
    %13 = sbr.rel (0) target = $region9
  $region8: #{dense_network_forward.1} parent=0 // pred_region
    _
  $region9: #{dense_network_forward.1} parent=0 // pred_fallthru
    _
  // Predicated region
  $region10: #{dense_network_forward.1} parent=0 // pred_check
    _
  $region11: #{dense_network_forward.1} parent=0 // pred_check_branch
    %15 = sbr.rel (0) target = $region13
  $region12: #{dense_network_forward.1} parent=0 // pred_region
    _
  $region13: #{dense_network_forward.1} parent=0 // pred_fallthru
    _
  // Predicated region
  $region14: #{dense_network_forward.1} parent=0 // pred_check
    _
  $region15: #{dense_network_forward.1} parent=0 // pred_check_branch
    %17 = sbr.rel (0) target = $region17
  $region16: #{dense_network_forward.1} parent=0 // pred_region
    _
  $region17: #{dense_network_forward.1} parent=0 // pred_fallthru
    _
  // Predicated region
  $region18: #{dense_network_forward.1} parent=0 // pred_check
    _
  $region19: #{dense_network_forward.1} parent=0 // pred_check_branch
    %19 = sbr.rel (0) target = $region21
  $region20: #{dense_network_forward.1} parent=0 // pred_region
    _
  $region21: #{dense_network_forward.1} parent=0 // pred_fallthru
    _
  %v20 = vld [vmem:[%s0] sm:$0xff]
  %v21 = vlaneseq
  %v22 = vand.u32 %v21, 127
  %23 = vset.pattern.permute.xlu0 0
  %24 = vperm.xlu0 %23, %v20
  %v25 = vpop.permute.xlu0 %24
  %vm26 = vcmp.eq.s32.totalorder %v25, %v22
  %v27 = vsel %vm26, 1, 0
  %v28 = vcvt.s32.f32 %v27
  %v29 = vadd.f32 %v28, 0.0
  %30 = vset.pattern.permute.xlu0 1
  %31 = vperm.xlu0 %30, %v20
  %v32 = vpop.permute.xlu0 %31
  %vm33 = vcmp.eq.s32.totalorder %v32, %v22
  %v34 = vsel %vm33, 1, 0
  %v35 = vcvt.s32.f32 %v34
  %v36 = vadd.f32 %v29, %v35
  %37 = vset.pattern.permute.xlu0 2
  %38 = vperm.xlu0 %37, %v20
  %v39 = vpop.permute.xlu0 %38
  %vm40 = vcmp.eq.s32.totalorder %v39, %v22
  %v41 = vsel %vm40, 1, 0
  %v42 = vcvt.s32.f32 %v41
  %v43 = vadd.f32 %v36, %v42
  %44 = vset.pattern.permute.xlu0 3
  %45 = vperm.xlu0 %44, %v20
  %v46 = vpop.permute.xlu0 %45
  %vm47 = vcmp.eq.s32.totalorder %v46, %v22
  %v48 = vsel %vm47, 1, 0
  %v49 = vcvt.s32.f32 %v48
  %v50 = vadd.f32 %v43, %v49
  %51 = vset.pattern.permute.xlu0 4
  %52 = vperm.xlu0 %51, %v20
  %v53 = vpop.permute.xlu0 %52
  %vm54 = vcmp.eq.s32.totalorder %v53, %v22
  %v55 = vsel %vm54, 1, 0
  %v56 = vcvt.s32.f32 %v55
  %v57 = vadd.f32 %v50, %v56
  %58 = vset.pattern.permute.xlu0 5
  %59 = vperm.xlu0 %58, %v20
  %v60 = vpop.permute.xlu0 %59
  %vm61 = vcmp.eq.s32.totalorder %v60, %v22
  %v62 = vsel %vm61, 1, 0
  %v63 = vcvt.s32.f32 %v62
  %v64 = vadd.f32 %v57, %v63
  %65 = vset.pattern.permute.xlu0 6
  %66 = vperm.xlu0 %65, %v20
  %v67 = vpop.permute.xlu0 %66
  %vm68 = vcmp.eq.s32.totalorder %v67, %v22
  %v69 = vsel %vm68, 1, 0
  %v70 = vcvt.s32.f32 %v69
  %v71 = vadd.f32 %v64, %v70
  %72 = vset.pattern.permute.xlu0 7
  %73 = vperm.xlu0 %72, %v20
  %v74 = vpop.permute.xlu0 %73
  %vm75 = vcmp.eq.s32.totalorder %v74, %v22
  %v76 = vsel %vm75, 1, 0
  %v77 = vcvt.s32.f32 %v76
  %v78 = vadd.f32 %v71, %v77
  %v79 = vld [vmem:[%s1] sm:$0xff]
  %v80 = vld [vmem:[%s1 + $0x8] sm:$0xff]
  %v81 = vld [vmem:[%s1 + $0x10] sm:$0xff]
  %v82 = vld [vmem:[%s1 + $0x18] sm:$0xff]
  %v83 = vld [vmem:[%s1 + $0x20] sm:$0xff]
  %v84 = vld [vmem:[%s1 + $0x28] sm:$0xff]
  %v85 = vld [vmem:[%s1 + $0x30] sm:$0xff]
  %v86 = vld [vmem:[%s1 + $0x38] sm:$0xff]
  %v87 = vld [vmem:[%s1 + $0x40] sm:$0xff]
  %v88 = vld [vmem:[%s1 + $0x48] sm:$0xff]
  %v89 = vld [vmem:[%s1 + $0x50] sm:$0xff]
  %v90 = vld [vmem:[%s1 + $0x58] sm:$0xff]
  %v91 = vld [vmem:[%s1 + $0x60] sm:$0xff]
  %v92 = vld [vmem:[%s1 + $0x68] sm:$0xff]
  %v93 = vld [vmem:[%s1 + $0x70] sm:$0xff]
  %v94 = vld [vmem:[%s1 + $0x78] sm:$0xff]
  %v95 = vld [vmem:[%s2] sm:$0x1]
  %v97 = vlaneseq
  %v98 = vshrl.u32 %v97, 7
  %v99 = vsub.s32 0, %v98
  %v100 = vrot.slane %v95, %v99
  %102 = vmatprep.subr.mxu0 0.0
  %103 = vmatpush1.msra.mxu0 %v79
  %104 = vmatprep.subr.mxu0 0.0
  %105 = vmatpush1.msra.mxu0 %v80
  %106 = vmatprep.subr.mxu0 0.0
  %107 = vmatpush1.msra.mxu0 %v81
  %108 = vmatprep.subr.mxu0 0.0
  %109 = vmatpush1.msra.mxu0 %v82
  %110 = vmatprep.subr.mxu0 0.0
  %111 = vmatpush1.msra.mxu0 %v83
  %112 = vmatprep.subr.mxu0 0.0
  %113 = vmatpush1.msra.mxu0 %v84
  %114 = vmatprep.subr.mxu0 0.0
  %115 = vmatpush1.msra.mxu0 %v85
  %116 = vmatprep.subr.mxu0 0.0
  %117 = vmatpush1.msra.mxu0 %v86
  %118 = vmatprep.subr.mxu0 0.0
  %119 = vmatpush1.msra.mxu0 %v87
  %120 = vmatprep.subr.mxu0 0.0
  %121 = vmatpush1.msra.mxu0 %v88
  %122 = vmatprep.subr.mxu0 0.0
  %123 = vmatpush1.msra.mxu0 %v89
  %124 = vmatprep.subr.mxu0 0.0
  %125 = vmatpush1.msra.mxu0 %v90
  %126 = vmatprep.subr.mxu0 0.0
  %127 = vmatpush1.msra.mxu0 %v91
  %128 = vmatprep.subr.mxu0 0.0
  %129 = vmatpush1.msra.mxu0 %v92
  %130 = vmatprep.subr.mxu0 0.0
  %131 = vmatpush1.msra.mxu0 %v93
  %132 = vmatprep.subr.mxu0 0.0
  %133 = vmatpush1.msra.mxu0 %v94
  %134 = vmatprep.subr.mxu0 0.0
  %135 = vmatpush1.msra.mxu0 0.0
  %136 = vmatprep.subr.mxu0 0.0
  %137 = vmatpush1.msra.mxu0 0.0
  %138 = vmatprep.subr.mxu0 0.0
  %139 = vmatpush1.msra.mxu0 0.0
  %140 = vmatprep.subr.mxu0 0.0
  %141 = vmatpush1.msra.mxu0 0.0
  %142 = vmatprep.subr.mxu0 0.0
  %143 = vmatpush1.msra.mxu0 0.0
  %144 = vmatprep.subr.mxu0 0.0
  %145 = vmatpush1.msra.mxu0 0.0
  %146 = vmatprep.subr.mxu0 0.0
  %147 = vmatpush1.msra.mxu0 0.0
  %148 = vmatprep.subr.mxu0 0.0
  %149 = vmatpush1.msra.mxu0 0.0
  %150 = vmatprep.subr.mxu0 0.0
  %151 = vmatpush1.msra.mxu0 0.0
  %152 = vmatprep.subr.mxu0 0.0
  %153 = vmatpush1.msra.mxu0 0.0
  %154 = vmatprep.subr.mxu0 0.0
  %155 = vmatpush1.msra.mxu0 0.0
  %156 = vmatprep.subr.mxu0 0.0
  %157 = vmatpush1.msra.mxu0 0.0
  %158 = vmatprep.subr.mxu0 0.0
  %159 = vmatpush1.msra.mxu0 0.0
  %160 = vmatprep.subr.mxu0 0.0
  %161 = vmatpush1.msra.mxu0 0.0
  %162 = vmatprep.subr.mxu0 0.0
  %163 = vmatpush1.msra.mxu0 0.0
  %164 = vmatprep.subr.mxu0 0.0
  %165 = vmatpush1.msra.mxu0 0.0
  %166 = vmatprep.mubr.f32.mxu0 0.0
  %167 = vmatmul.mubr.f32.gmra.mrb[0].mxu0 %v78
  %v168 = vpop.f32.mrb[0].mxu0
  %v169 = vadd.f32 %v100, %v168
  %v170 = vpop.f32.mrb[0].mxu0
  %171 = vdwg.mxu0
  %v172 = vmax.f32 %v169, 0.0
  %v173 = vld [vmem:[%s3] sm:$0xff]
  %v174 = vld [vmem:[%s3 + $0x8] sm:$0xff]
  %v175 = vld [vmem:[%s3 + $0x10] sm:$0xff]
  %v176 = vld [vmem:[%s3 + $0x18] sm:$0xff]
  %v177 = vld [vmem:[%s3 + $0x20] sm:$0xff]
  %v178 = vld [vmem:[%s3 + $0x28] sm:$0xff]
  %v179 = vld [vmem:[%s3 + $0x30] sm:$0xff]
  %v180 = vld [vmem:[%s3 + $0x38] sm:$0xff]
  %v181 = vld [vmem:[%s3 + $0x40] sm:$0xff]
  %v182 = vld [vmem:[%s3 + $0x48] sm:$0xff]
  %v183 = vld [vmem:[%s3 + $0x50] sm:$0xff]
  %v184 = vld [vmem:[%s3 + $0x58] sm:$0xff]
  %v185 = vld [vmem:[%s3 + $0x60] sm:$0xff]
  %v186 = vld [vmem:[%s3 + $0x68] sm:$0xff]
  %v187 = vld [vmem:[%s3 + $0x70] sm:$0xff]
  %v188 = vld [vmem:[%s3 + $0x78] sm:$0xff]
  %v189 = vld [vmem:[%s4] sm:$0x1]
  %v191 = vlaneseq
  %v192 = vshrl.u32 %v191, 7
  %v193 = vsub.s32 0, %v192
  %v194 = vrot.slane %v189, %v193
  %196 = vmatprep.subr.mxu0 0.0
  %197 = vmatpush1.msra.mxu0 %v173
  %198 = vmatprep.subr.mxu0 0.0
  %199 = vmatpush1.msra.mxu0 %v174
  %200 = vmatprep.subr.mxu0 0.0
  %201 = vmatpush1.msra.mxu0 %v175
  %202 = vmatprep.subr.mxu0 0.0
  %203 = vmatpush1.msra.mxu0 %v176
  %204 = vmatprep.subr.mxu0 0.0
  %205 = vmatpush1.msra.mxu0 %v177
  %206 = vmatprep.subr.mxu0 0.0
  %207 = vmatpush1.msra.mxu0 %v178
  %208 = vmatprep.subr.mxu0 0.0
  %209 = vmatpush1.msra.mxu0 %v179
  %210 = vmatprep.subr.mxu0 0.0
  %211 = vmatpush1.msra.mxu0 %v180
  %212 = vmatprep.subr.mxu0 0.0
  %213 = vmatpush1.msra.mxu0 %v181
  %214 = vmatprep.subr.mxu0 0.0
  %215 = vmatpush1.msra.mxu0 %v182
  %216 = vmatprep.subr.mxu0 0.0
  %217 = vmatpush1.msra.mxu0 %v183
  %218 = vmatprep.subr.mxu0 0.0
  %219 = vmatpush1.msra.mxu0 %v184
  %220 = vmatprep.subr.mxu0 0.0
  %221 = vmatpush1.msra.mxu0 %v185
  %222 = vmatprep.subr.mxu0 0.0
  %223 = vmatpush1.msra.mxu0 %v186
  %224 = vmatprep.subr.mxu0 0.0
  %225 = vmatpush1.msra.mxu0 %v187
  %226 = vmatprep.subr.mxu0 0.0
  %227 = vmatpush1.msra.mxu0 %v188
  %228 = vmatprep.subr.mxu0 0.0
  %229 = vmatpush1.msra.mxu0 0.0
  %230 = vmatprep.subr.mxu0 0.0
  %231 = vmatpush1.msra.mxu0 0.0
  %232 = vmatprep.subr.mxu0 0.0
  %233 = vmatpush1.msra.mxu0 0.0
  %234 = vmatprep.subr.mxu0 0.0
  %235 = vmatpush1.msra.mxu0 0.0
  %236 = vmatprep.subr.mxu0 0.0
  %237 = vmatpush1.msra.mxu0 0.0
  %238 = vmatprep.subr.mxu0 0.0
  %239 = vmatpush1.msra.mxu0 0.0
  %240 = vmatprep.subr.mxu0 0.0
  %241 = vmatpush1.msra.mxu0 0.0
  %242 = vmatprep.subr.mxu0 0.0
  %243 = vmatpush1.msra.mxu0 0.0
  %244 = vmatprep.subr.mxu0 0.0
  %245 = vmatpush1.msra.mxu0 0.0
  %246 = vmatprep.subr.mxu0 0.0
  %247 = vmatpush1.msra.mxu0 0.0
  %248 = vmatprep.subr.mxu0 0.0
  %249 = vmatpush1.msra.mxu0 0.0
  %250 = vmatprep.subr.mxu0 0.0
  %251 = vmatpush1.msra.mxu0 0.0
  %252 = vmatprep.subr.mxu0 0.0
  %253 = vmatpush1.msra.mxu0 0.0
  %254 = vmatprep.subr.mxu0 0.0
  %255 = vmatpush1.msra.mxu0 0.0
  %256 = vmatprep.subr.mxu0 0.0
  %257 = vmatpush1.msra.mxu0 0.0
  %258 = vmatprep.subr.mxu0 0.0
  %259 = vmatpush1.msra.mxu0 0.0
  %260 = vmatprep.mubr.f32.mxu0 0.0
  %261 = vmatmul.mubr.f32.gmra.mrb[0].mxu0 %v172
  %v262 = vpop.f32.mrb[0].mxu0
  %v263 = vadd.f32 %v194, %v262
  %v264 = vpop.f32.mrb[0].mxu0
  %265 = vdwg.mxu0
  %v266 = vmax.f32 %v263, 0.0
  %vm267 = vcmask 64512
  %268 = vst.msk [vmem:[%s5] sm:$0xff] %vm267, %v266
  // Predicated region
  $region22: #{dense_network_forward.1} parent=0 // pred_check
    _
  $region23: #{dense_network_forward.1} parent=0 // pred_check_branch
    %270 = sbr.rel (0) target = $region25
  $region24: #{dense_network_forward.1} parent=0 // pred_region
    _
  $region25: #{dense_network_forward.1} parent=0 // pred_fallthru
    _
  // Predicated region
  $region26: #{dense_network_forward.1} parent=0 // pred_check
    _
  $region27: #{dense_network_forward.1} parent=0 // pred_check_branch
    %272 = sbr.rel (0) target = $region29
  $region28: #{dense_network_forward.1} parent=0 // pred_region
    _
  $region29: #{dense_network_forward.1} parent=0 // pred_fallthru
    _

</llo_original>
